<compile_context>
chip_gen: v6e
topology: v6e:2x2x1
jax: 0.10.0
libtpu: 0.0.40
codegen_flags: <defaults>
</compile_context>

<pallas_src>
import jax
import jax.numpy as jnp
from jax.experimental import pallas as pl
from jax.experimental.pallas import tpu as pltpu


def _round_up(x, m):
    return (x + m - 1) // m * m


def _cdiv(a, b):
    return (a + b - 1) // b


def _patch_proj_kernel(x_ref, w_ref, a_ref, o_ref):
    """One grid step: project TN packed patch rows and add the fused addend.

    x_ref: (1, TN, R*PV)    packed flattened patches (input dtype)
    w_ref: (R*PV, R*slot)   block-diagonal projection weight (compute dtype)
    a_ref: (TN, R*slot)     packed (pos[1:] + bias) addend (f32)
    o_ref: (1, TN, R*slot)  output rows (final dtype) — one lane-dense store
    """
    x = x_ref[0].astype(w_ref.dtype)          # in-kernel cast: no extra XLA HBM pass
    acc = jnp.dot(x, w_ref[...], preferred_element_type=jnp.float32)
    o_ref[0] = (acc + a_ref[...]).astype(o_ref.dtype)


def patch_embedding(x, w, b, cls_token, pos_embedding, patch_size, *,
                    tm_rows=2048, compute_dtype=jnp.bfloat16,
                    min_rows_for_pallas=512,
                    vmem_limit_bytes=32 * 1024 * 1024):
    """Forward pass of PatchEmbedding.

    x:             (B, seq_len, n_vars)
    w:             (d_model, patch_size*n_vars)   (PyTorch Linear weight layout)
    b:             (d_model,)
    cls_token:     (1, 1, d_model)
    pos_embedding: (1, n_patches+1, d_model)
    tm_rows:       ~patch rows processed per grid step (amortizes per-step overhead)
    compute_dtype: matmul operand dtype (bf16 = native MXU; f32 for validation)

    Returns: (B, n_patches+1, d_model), dtype of x.
    """
    B, S, V = x.shape
    P = patch_size
    assert S % P == 0, f"seq_len={S} must be divisible by patch_size={P}"
    N = S // P
    PV = P * V
    D = w.shape[0]
    out_dtype = x.dtype

    # 'b (n p) v -> b n (p v)' is a free row-major reshape.
    x_p = x.reshape(B, N, PV)
    pos = pos_embedding.reshape(N + 1, D).astype(jnp.float32)
    cls_row = cls_token.reshape(1, 1, D).astype(jnp.float32) + pos[0:1, :]   # (1,1,D)

    M = B * N
    if M < min_rows_for_pallas:
        # Tiny problem: a fused XLA dot beats pallas_call launch/pipeline overhead.
        proj = jnp.einsum("bnk,dk->bnd", x_p.astype(jnp.float32),
                          w.astype(jnp.float32),
                          precision=jax.lax.Precision.HIGHEST)
        body = proj + (pos[1:, :] + b.astype(jnp.float32))
        out = jnp.concatenate([jnp.broadcast_to(cls_row, (B, 1, D)), body], axis=1)
        return out.astype(out_dtype)

    # ---- lane-packing factor: R patches per 128-lane output row -----------------
    if D <= 128 and 128 % D == 0:
        R, slot = 128 // D, D                 # fully dense lanes, no column padding
    elif D % 128 == 0:
        R, slot = 1, D
    else:
        R, slot = 1, _round_up(D, 128)        # fall back to lane-padded columns
    L = R * slot                              # kernel output lane width (mult of 128)

    # ---- row-tile sizing ---------------------------------------------------------
    q = 16 if (x.dtype.itemsize == 2 or jnp.dtype(out_dtype).itemsize == 2) else 8
    npk0 = _cdiv(N, R)                        # packed rows per batch element
    tn_max = max(q, (tm_rows // R) // q * q)
    if B == 1 and npk0 > 2 * q:
        # keep >= 2 grid steps so both v7x TensorCores get work
        tn_max = min(tn_max, _round_up(_cdiv(npk0, 2), q))
    tn = npk0 if npk0 <= tn_max else tn_max
    npk_p = _round_up(npk0, tn)               # padded packed rows per batch
    nr = npk_p * R                            # padded patch rows per batch

    if nr != N:
        x_p = jnp.pad(x_p, ((0, 0), (0, nr - N), (0, 0)))
    x_pack = x_p.reshape(B, npk_p, R * PV)    # free row-major pack (intra-batch)

    # ---- block-diagonal weight: each packed patch gets its own D-wide lane slot --
    w_t = w.astype(jnp.float32).T             # (PV, D)
    w_blk = jnp.zeros((R * PV, L), jnp.float32)
    for i in range(R):
        w_blk = w_blk.at[i * PV:(i + 1) * PV, i * slot:i * slot + D].set(w_t)
    w_blk = w_blk.astype(compute_dtype)

    # ---- fused per-patch addend: pos[1:] + bias, packed like the output ----------
    addend = pos[1:, :] + b.astype(jnp.float32)                        # (N, D)
    addend = jnp.pad(addend, ((0, nr - N), (0, slot - D)))
    a_pack = addend.reshape(npk_p, L)

    n_j = npk_p // tn
    out_pack = pl.pallas_call(
        _patch_proj_kernel,
        out_shape=jax.ShapeDtypeStruct((B, npk_p, L), out_dtype),
        grid_spec=pltpu.PrefetchScalarGridSpec(
            num_scalar_prefetch=0,
            grid=(n_j, B),                         # batch innermost -> addend reuse
            in_specs=[
                pl.BlockSpec((1, tn, R * PV), lambda ti, bi: (bi, ti, 0)),
                pl.BlockSpec((R * PV, L),     lambda ti, bi: (0, 0)),
                pl.BlockSpec((tn, L),         lambda ti, bi: (ti, 0)),
            ],
            out_specs=pl.BlockSpec((1, tn, L),    lambda ti, bi: (bi, ti, 0)),
        ),
        compiler_params=pltpu.CompilerParams(
            dimension_semantics=("parallel", "parallel"),
            vmem_limit_bytes=vmem_limit_bytes,
        ),
    )(x_pack, w_blk, a_pack)

    body = out_pack.reshape(B, nr, slot)           # free row-major unpack
    if nr != N or slot != D:
        body = body[:, :N, :D]
    # TODO(synk): the cls-row prepend stays as a one-row XLA concat; fusing it
    # in-kernel would need a packed input shifted by one row per batch (an extra
    # input copy that costs more HBM traffic than the concat itself).
    cls_rows = jnp.broadcast_to(cls_row, (B, 1, D)).astype(out_dtype)
    return jnp.concatenate([cls_rows, body], axis=1)


def reference(x, w, b, cls_token, pos_embedding, patch_size):
    B, S, V = x.shape
    N = S // patch_size
    xp = x.reshape(B, N, patch_size * V)
    proj = jnp.einsum("bnk,dk->bnd", xp, w,
                      precision=jax.lax.Precision.HIGHEST) + b
    cls = jnp.broadcast_to(cls_token, (B, 1, w.shape[0]))
    out = jnp.concatenate([cls, proj], axis=1)
    return out + pos_embedding


if __name__ == "__main__":
    root = jax.random.PRNGKey(0)

    def make_inputs(key, batch, seq_len, patch_size, d_model, n_vars):
        kx, kw, kb, kc, kp = jax.random.split(key, 5)
        n_patches = seq_len // patch_size
        x = jax.random.normal(kx, (batch, seq_len, n_vars), dtype=jnp.float32)
        w = jax.random.normal(kw, (d_model, patch_size * n_vars), jnp.float32) * 0.02
        b = jax.random.normal(kb, (d_model,), jnp.float32) * 0.02
        cls_token = jax.random.normal(kc, (1, 1, d_model), jnp.float32)
        pos_embedding = jax.random.normal(kp, (1, n_patches + 1, d_model), jnp.float32)
        return x, w, b, cls_token, pos_embedding

    def check(out, ref, atol, tag):
        out = jax.block_until_ready(out)
        assert out.shape == ref.shape, (tag, out.shape, ref.shape)
        err = float(jnp.max(jnp.abs(out.astype(jnp.float32) - ref)))
        assert err <= atol, (tag, err)

    k1, k2, k3 = jax.random.split(root, 3)

    # 1) module-default small config (batch=2, seq_len=16, patch=4, d_model=32, vars=4)
    args1 = make_inputs(k1, batch=2, seq_len=16, patch_size=4, d_model=32, n_vars=4)
    ref1 = reference(*args1, patch_size=4)
    check(patch_embedding(*args1, patch_size=4), ref1, 1e-3, "small/xla-guard")
    check(patch_embedding(*args1, patch_size=4, compute_dtype=jnp.float32,
                          min_rows_for_pallas=0), ref1, 1e-3, "small/pallas-f32")
    check(patch_embedding(*args1, patch_size=4, compute_dtype=jnp.bfloat16,
                          min_rows_for_pallas=0), ref1, 3e-2, "small/pallas-bf16")

    # 2) tiled config: multi-step grid, addend reuse and row-padding path
    #    (N=80 is not a multiple of tn*R with tm_rows=32 -> exercises padding/slice)
    args2 = make_inputs(k2, batch=3, seq_len=320, patch_size=4, d_model=32, n_vars=4)
    ref2 = reference(*args2, patch_size=4)
    check(patch_embedding(*args2, patch_size=4, compute_dtype=jnp.float32,
                          tm_rows=32, min_rows_for_pallas=0), ref2, 1e-3,
          "tiled/pallas-f32")
    check(patch_embedding(*args2, patch_size=4, compute_dtype=jnp.bfloat16,
                          min_rows_for_pallas=0), ref2, 3e-2, "tiled/pallas-bf16")

    # 3) d_model that does not divide 128 -> lane-padded (R=1) fallback path
    args3 = make_inputs(k3, batch=2, seq_len=64, patch_size=4, d_model=48, n_vars=2)
    ref3 = reference(*args3, patch_size=4)
    check(patch_embedding(*args3, patch_size=4, compute_dtype=jnp.float32,
                          min_rows_for_pallas=0), ref3, 1e-3, "padD/pallas-f32")

    print("KERNEL_OK")
</pallas_src>

<mosaic_0001>
module attributes {stable_mosaic.version = 11 : i64} {
  func.func @_patch_proj_kernel(%arg0: i32, %arg1: i32, %arg2: memref<1x1x64xf32, #tpu.memory_space<vmem>>, %arg3: memref<64x128xf32, #tpu.memory_space<vmem>>, %arg4: memref<1x128xf32, #tpu.memory_space<vmem>>, %arg5: memref<1x1x128xf32, #tpu.memory_space<vmem>>) attributes {dimension_semantics = [#tpu.dimension_semantics<parallel>, #tpu.dimension_semantics<parallel>], iteration_bounds = array<i64: 1, 2>, scalar_prefetch = 0 : i64, scratch_operands = 0 : i64, tpu.core_type = #tpu.core_type<tc>, window_params = [{transform_indices = @transform_0, window_bounds = array<i64: 1, 1, 64>}, {pipeline_mode = #tpu.pipeline_mode<synchronous>, transform_indices = @transform_1, window_bounds = array<i64: 64, 128>}, {transform_indices = @transform_2, window_bounds = array<i64: 1, 128>}, {transform_indices = @transform_3, window_bounds = array<i64: 1, 1, 128>}]} {
    %c0 = arith.constant 0 : index
    %c0_0 = arith.constant 0 : index
    %c0_1 = arith.constant 0 : index
    %0 = vector.load %arg2[%c0, %c0_0, %c0_1] : memref<1x1x64xf32, #tpu.memory_space<vmem>>, vector<1x1x64xf32>
    %1 = vector.shape_cast %0 : vector<1x1x64xf32> to vector<1x64xf32>
    %c0_2 = arith.constant 0 : index
    %c0_3 = arith.constant 0 : index
    %2 = vector.load %arg3[%c0_2, %c0_3] : memref<64x128xf32, #tpu.memory_space<vmem>>, vector<64x128xf32>
    %cst = arith.constant dense<0.000000e+00> : vector<1x128xf32>
    %3 = tpu.matmul %1, %2, %cst {dimension_numbers = #tpu.dot_dimension_numbers<[1], [0], [0], [1], [0, 0, 1, 1], [], []>} : vector<1x64xf32>, vector<64x128xf32>, vector<1x128xf32> -> vector<1x128xf32>
    %c0_4 = arith.constant 0 : index
    %c0_5 = arith.constant 0 : index
    %4 = vector.load %arg4[%c0_4, %c0_5] : memref<1x128xf32, #tpu.memory_space<vmem>>, vector<1x128xf32>
    %5 = arith.addf %3, %4 : vector<1x128xf32>
    %c0_6 = arith.constant 0 : index
    %c0_7 = arith.constant 0 : index
    %c0_8 = arith.constant 0 : index
    %6 = vector.load %arg5[%c0_6, %c0_7, %c0_8] : memref<1x1x128xf32, #tpu.memory_space<vmem>>, vector<1x1x128xf32>
    %7 = vector.shape_cast %6 : vector<1x1x128xf32> to vector<1x128xf32>
    %8 = vector.shape_cast %5 : vector<1x128xf32> to vector<1x1x128xf32>
    tpu.vector_store %arg5[%c0_6, %c0_7, %c0_8], %8 {strides = array<i32>} : memref<1x1x128xf32, #tpu.memory_space<vmem>>, vector<1x1x128xf32>,
    return
  }
  func.func @transform_0(%arg0: i32, %arg1: i32) -> (i32, i32, i32) {
    %c0_i32 = arith.constant 0 : i32
    %c0_i32_0 = arith.constant 0 : i32
    return %arg1, %arg0, %c0_i32 : i32, i32, i32
  }
  func.func @transform_1(%arg0: i32, %arg1: i32) -> (i32, i32) {
    %c0_i32 = arith.constant 0 : i32
    %c0_i32_0 = arith.constant 0 : i32
    %c0_i32_1 = arith.constant 0 : i32
    return %c0_i32, %c0_i32_0 : i32, i32
  }
  func.func @transform_2(%arg0: i32, %arg1: i32) -> (i32, i32) {
    %c0_i32 = arith.constant 0 : i32
    %c0_i32_0 = arith.constant 0 : i32
    return %arg0, %c0_i32 : i32, i32
  }
  func.func @transform_3(%arg0: i32, %arg1: i32) -> (i32, i32, i32) {
    %c0_i32 = arith.constant 0 : i32
    %c0_i32_0 = arith.constant 0 : i32
    return %arg1, %arg0, %c0_i32 : i32, i32, i32
  }
}

</mosaic_0001>

<llo_original>
// kernel: tpu_custom_call.1
$region0: #{tpu_custom_call.1}
  #allocation0 [shape = 'u32[]', space=smem, size = 0x4, offset = 0x4, fixed_abs, tag = 'smem constant byte address 0x4 - core index']
  #allocation1 [shape = 'u32[144,128]{1,0:T(1,128)}', space=vmem, size = 0x12000, scoped, tag = 'internal scratch']
  %s0 = inlined_call_operand.hbm [shape: f32[2,1,64], index: 0, kind: input, shape index: {}]
  %s1 = inlined_call_operand.hbm [shape: f32[64,128], index: 1, kind: input, shape index: {}]
  %s2 = inlined_call_operand.vmem [shape: f32[1,128], index: 2, kind: input, shape index: {}]
  %s3 = inlined_call_operand.hbm [shape: f32[2,1,128], index: 3, kind: output, shape index: {}]
  %s4 = sld [smem:[#allocation0]]
  $region53: #{tpu_custom_call.1} parent=0
    _
  %s6 = ssub.s32 1, %s4
  %s7 = scalar_select 0, %s6, %s4
  $region1: #{tpu_custom_call.1} parent=0
    #allocation2 [shape = 'u8[1024]{0}', space=vmem, size = 0x400, scoped, tag = 'input window, operand 0']
    #allocation3 [shape = 's32[2]{0}', space=sflag, size = 0x8, scoped, tag = 'scoped memory for tpu_custom_call.1']
    #allocation4 [shape = 's32[2]{0}', space=sflag, size = 0x8, scoped, tag = 'scoped memory for tpu_custom_call.1']
    #allocation5 [shape = 'u8[32768]{0}', space=vmem, size = 0x8000, scoped, tag = 'input window, operand 1, single buffered']
    #allocation6 [shape = 's32[1]{0}', space=sflag, size = 0x4, scoped, tag = 'scoped memory for tpu_custom_call.1']
    #allocation7 [shape = 'u8[1024]{0}', space=vmem, size = 0x400, scoped, tag = 'output window, operand 0']
    %8 = vsyncpa [#allocation3], 0
    %s9 = scalar_lea.sflag [#allocation3], 1
    %10 = vsyncpa %s9, 0
    %11 = vsyncpa [#allocation6], 0
    %12 = vsyncpa [#allocation4], 0
    %s13 = scalar_lea.sflag [#allocation4], 1
    %14 = vsyncpa %s13, 0
    loop: start=0, step=1, limit=4
    $region2: #{tpu_custom_call.1} parent=1 // loop_pre_header
      _
    $region3: #{tpu_custom_call.1} parent=1 // loop_header
      %s16 = sphi 0, %s20
      %p17 = scmp.ge.s32.totalorder %s16, 4
      %s23 = sphi 0, %s35
      %s24 = sphi 0, %s31
      %s25 = sphi 0, %s23
      %s26 = sphi 0, %s24
      %s27 = sphi 0, %s25
      %s28 = sphi 0, %s26
      %s40 = sphi 0, %s42
      %s43 = sphi 0, %s40
      %s44 = sphi 0, %s43
      %s60 = sphi 0, %s44
      %s64 = sphi 0, %s64
      %s66 = sphi 0, %s64
      %s67 = sphi 0, %s66
      %s81 = sphi 0, %s67
      %s87 = sphi 0, %s89
      %s90 = sphi 0, %s87
      %s91 = sphi 0, %s90
      %s107 = sphi 0, %s91
      %s115 = sphi 0, %s117
      %s118 = sphi 0, %s115
      %s119 = sphi 0, %s118
      %s135 = sphi 0, %s119
    $region4: #{tpu_custom_call.1} parent=1 // loop_header_branch
      %19 = sbr.rel (%p17) target = $region8
    $region5: #{tpu_custom_call.1} parent=1 // loop_body
      %s21 = ssub.s32 %s16, 1
      %s22 = ssub.s32 %s16, 2
      %s29 = sadd.s32 1, %s24
      %p30 = scmp.ge.s32.totalorder %s29, 2
      %s31 = scalar_select %p30, 0, %s29
      %s32 = sadd.s32 1, %s23
      %s33 = scalar_select %p30, %s32, %s23
      %p34 = scmp.ge.s32.totalorder %s33, 1
      %s35 = scalar_select %p34, 0, %s33
      %s36 = ssub.s32 %s24, %s31
      %s37 = ssub.s32 %s23, %s35
      %s38 = sor.u32 %s36, %s37
      %p39 = scmp.eq.s32.totalorder %s38, 0
      %s41 = sadd.s32 %s40, 1
      %s42 = scalar_select %p39, %s40, %s41
      %p45 = pneg %p39
      %p46 = scmp.eq.s32.totalorder %s16, 1
      %p47 = por %p45, %p46
      %p48 = scmp.ne.s32.totalorder %s40, %s43
      %p49 = scmp.eq.s32.totalorder %s16, 0
      %p50 = por %p48, %p49
      %p51 = scmp.ne.s32.totalorder %s40, %s43
      %p52 = scmp.eq.s32.totalorder %s21, 1
      %p53 = por %p51, %p52
      %p54 = scmp.ne.s32.totalorder %s43, %s44
      %p55 = scmp.eq.s32.totalorder %s21, 0
      %p56 = por %p54, %p55
      %p57 = scmp.ne.s32.totalorder %s43, %s44
      %p58 = scmp.eq.s32.totalorder %s22, 1
      %p59 = por %p57, %p58
      %p61 = scmp.ne.s32.totalorder %s44, %s60
      %p62 = scmp.eq.s32.totalorder %s22, 0
      %p63 = por %p61, %p62
      %s65 = sadd.s32 %s64, 1
      %p68 = scmp.eq.s32.totalorder %s16, 1
      %p69 = scmp.ne.s32.totalorder %s64, %s66
      %p70 = scmp.eq.s32.totalorder %s16, 0
      %p71 = por %p69, %p70
      %p72 = scmp.ne.s32.totalorder %s64, %s66
      %p73 = scmp.eq.s32.totalorder %s21, 1
      %p74 = por %p72, %p73
      %p75 = scmp.ne.s32.totalorder %s66, %s67
      %p76 = scmp.eq.s32.totalorder %s21, 0
      %p77 = por %p75, %p76
      %p78 = scmp.ne.s32.totalorder %s66, %s67
      %p79 = scmp.eq.s32.totalorder %s22, 1
      %p80 = por %p78, %p79
      %p82 = scmp.ne.s32.totalorder %s67, %s81
      %p83 = scmp.eq.s32.totalorder %s22, 0
      %p84 = por %p82, %p83
      %s85 = ssub.s32 %s23, %s35
      %p86 = scmp.eq.s32.totalorder %s85, 0
      %s88 = sadd.s32 %s87, 1
      %s89 = scalar_select %p86, %s87, %s88
      %p92 = pneg %p86
      %p93 = scmp.eq.s32.totalorder %s16, 1
      %p94 = por %p92, %p93
      %p95 = scmp.ne.s32.totalorder %s87, %s90
      %p96 = scmp.eq.s32.totalorder %s16, 0
      %p97 = por %p95, %p96
      %p98 = scmp.ne.s32.totalorder %s87, %s90
      %p99 = scmp.eq.s32.totalorder %s21, 1
      %p100 = por %p98, %p99
      %p101 = scmp.ne.s32.totalorder %s90, %s91
      %p102 = scmp.eq.s32.totalorder %s21, 0
      %p103 = por %p101, %p102
      %p104 = scmp.ne.s32.totalorder %s90, %s91
      %p105 = scmp.eq.s32.totalorder %s22, 1
      %p106 = por %p104, %p105
      %p108 = scmp.ne.s32.totalorder %s91, %s107
      %p109 = scmp.eq.s32.totalorder %s22, 0
      %p110 = por %p108, %p109
      %s111 = ssub.s32 %s24, %s31
      %s112 = ssub.s32 %s23, %s35
      %s113 = sor.u32 %s111, %s112
      %p114 = scmp.eq.s32.totalorder %s113, 0
      %s116 = sadd.s32 %s115, 1
      %s117 = scalar_select %p114, %s115, %s116
      %p120 = pneg %p114
      %p121 = scmp.eq.s32.totalorder %s16, 1
      %p122 = por %p120, %p121
      %p123 = scmp.ne.s32.totalorder %s115, %s118
      %p124 = scmp.eq.s32.totalorder %s16, 0
      %p125 = por %p123, %p124
      %p126 = scmp.ne.s32.totalorder %s115, %s118
      %p127 = scmp.eq.s32.totalorder %s21, 1
      %p128 = por %p126, %p127
      %p129 = scmp.ne.s32.totalorder %s118, %s119
      %p130 = scmp.eq.s32.totalorder %s21, 0
      %p131 = por %p129, %p130
      %p132 = scmp.ne.s32.totalorder %s118, %s119
      %p133 = scmp.eq.s32.totalorder %s22, 1
      %p134 = por %p132, %p133
      %p136 = scmp.ne.s32.totalorder %s119, %s135
      %p137 = scmp.eq.s32.totalorder %s22, 0
      %p138 = por %p136, %p137
      %p139 = scmp.le.s32.totalorder 1, %s16
      %p140 = scmp.lt.s32.totalorder %s16, 3
      %p141 = pnand %p139, %p140
      %p142 = pneg %p141
      // Predicated region
      $region9: #{tpu_custom_call.1} parent=5 // pred_check
        _
      $region10: #{tpu_custom_call.1} parent=5 // pred_check_branch
        %144 = sbr.rel (%p141) target = $region12
      $region11: #{tpu_custom_call.1} parent=5 // pred_region
        %s145 = ssub.s32 %s16, 1
        // Predicated region
        $region13: #{tpu_custom_call.1} parent=11 // pred_check
          %p146 = pneg %p77
        $region14: #{tpu_custom_call.1} parent=11 // pred_check_branch
          %148 = sbr.rel (%p146) target = $region16
        $region15: #{tpu_custom_call.1} parent=11 // pred_region
          %s150 = ssub.s32 1024, 1024
          %151 = vsyncadd [#allocation6], %s150
          %s152 = sshll.u32 [#allocation5], 4
          %s153 = int_to_ptr.vmem [resolvable:$true] %s152
          %158 = dma.hbm_to_vmem [thread:$0]  %s1, 1024, %s153, [#allocation6], 128, 128, 8
        $region16: #{tpu_custom_call.1} parent=11 // pred_fallthru
          _
        // Predicated region
        $region17: #{tpu_custom_call.1} parent=11 // pred_check
          %p159 = pneg %p103
        $region18: #{tpu_custom_call.1} parent=11 // pred_check_branch
          %161 = sbr.rel (%p159) target = $region20
        $region19: #{tpu_custom_call.1} parent=11 // pred_region
          %p162 = scmp.lt.s32.totalorder %s25, 0
          %s163 = scalar_select %p162, %s25, 0
          %s164 = scalar_lea.vmem %s2, %s163
        $region20: #{tpu_custom_call.1} parent=11 // pred_fallthru
          _
      $region12: #{tpu_custom_call.1} parent=5 // pred_fallthru
        _
      %p165 = scmp.lt.s32.totalorder %s16, 2
      // Predicated region
      $region21: #{tpu_custom_call.1} parent=5 // pred_check
        %p166 = pneg %p165
      $region22: #{tpu_custom_call.1} parent=5 // pred_check_branch
        %168 = sbr.rel (%p166) target = $region24
      $region23: #{tpu_custom_call.1} parent=5 // pred_region
        // Predicated region
        $region25: #{tpu_custom_call.1} parent=23 // pred_check
          %p169 = pneg %p50
        $region26: #{tpu_custom_call.1} parent=23 // pred_check_branch
          %171 = sbr.rel (%p169) target = $region28
        $region27: #{tpu_custom_call.1} parent=23 // pred_region
          %s172 = sand.u32 %s40, 1
          %s173 = scalar_lea.sflag [#allocation3], %s172
          %s174 = sand.u32 %s40, 1
          %s175 = scalar_lea.vmem [#allocation2], %s174
          %s177 = ssub.s32 16, 16
          %178 = vsyncadd %s173, %s177
          %s179 = sadd.s32 %s23, %s24
          %s180 = smul.addr %s179, 16
          %s181 = scalar_lea.hbm %s0, %s180
          %s183 = sshll.u32 %s175, 4
          %s184 = int_to_ptr.vmem [resolvable:$true] %s183
          %186 = dma.hbm_to_vmem [thread:$0]  %s181, 16, %s184, %s173
        $region28: #{tpu_custom_call.1} parent=23 // pred_fallthru
          _
      $region24: #{tpu_custom_call.1} parent=5 // pred_fallthru
        _
      %p187 = scmp.le.s32.totalorder 1, %s16
      %p188 = scmp.lt.s32.totalorder %s16, 3
      %p189 = pnand %p187, %p188
      %p190 = pneg %p189
      // Predicated region
      $region29: #{tpu_custom_call.1} parent=5 // pred_check
        _
      $region30: #{tpu_custom_call.1} parent=5 // pred_check_branch
        %192 = sbr.rel (%p189) target = $region32
      $region31: #{tpu_custom_call.1} parent=5 // pred_region
        %s193 = ssub.s32 %s16, 1
        %s194 = sand.u32 %s43, 1
        %s195 = scalar_lea.sflag [#allocation3], %s194
        %s196 = sand.u32 %s43, 1
        %s197 = scalar_lea.vmem [#allocation2], %s196
        // Predicated region
        $region33: #{tpu_custom_call.1} parent=31 // pred_check
          %p198 = pneg %p56
        $region34: #{tpu_custom_call.1} parent=31 // pred_check_branch
          %200 = sbr.rel (%p198) target = $region36
        $region35: #{tpu_custom_call.1} parent=31 // pred_region
          %201 = dma.done %s195, 16
        $region36: #{tpu_custom_call.1} parent=31 // pred_fallthru
          _
        // Predicated region
        $region37: #{tpu_custom_call.1} parent=31 // pred_check
          %p202 = pneg %p77
        $region38: #{tpu_custom_call.1} parent=31 // pred_check_branch
          %204 = sbr.rel (%p202) target = $region40
        $region39: #{tpu_custom_call.1} parent=31 // pred_region
          %205 = dma.done [#allocation6], 1024
        $region40: #{tpu_custom_call.1} parent=31 // pred_fallthru
          _
        %s206 = sand.u32 %s43, 1
        %s207 = scalar_lea.sflag [#allocation3], %s206
        %s208 = sand.u32 %s43, 1
        %s209 = scalar_lea.vmem [#allocation2], %s208
        %p210 = pneg %p56
        %p211 = pneg %p53
        %p212 = pneg %p77
        %p213 = pneg %p74
        %p214 = scmp.lt.s32.totalorder %s25, 0
        %s215 = scalar_select %p214, %s25, 0
        %s216 = scalar_lea.vmem %s2, %s215
        %p217 = pneg %p103
        %p218 = pneg %p100
        %p219 = pneg %p131
        %p220 = pneg %p128
        %s221 = sand.u32 %s118, 1
        %s222 = scalar_lea.sflag [#allocation4], %s221
        %s223 = sand.u32 %s118, 1
        %s224 = scalar_lea.vmem [#allocation7], %s223
        %p225 = scmp.lt.s32.totalorder %s25, 0
        %s226 = scalar_select %p225, %s25, 0
        %s227 = scalar_lea.vmem %s2, %s226
        %v228 = vld [vmem:[%s197] sm:$0x1]
        %v229 = vld [vmem:[#allocation5] sm:$0xff]
        %v230 = vld [vmem:[#allocation5 + $0x8] sm:$0xff]
        %v231 = vld [vmem:[#allocation5 + $0x10] sm:$0xff]
        %v232 = vld [vmem:[#allocation5 + $0x18] sm:$0xff]
        %v233 = vld [vmem:[#allocation5 + $0x20] sm:$0xff]
        %v234 = vld [vmem:[#allocation5 + $0x28] sm:$0xff]
        %v235 = vld [vmem:[#allocation5 + $0x30] sm:$0xff]
        %v236 = vld [vmem:[#allocation5 + $0x38] sm:$0xff]
        %v237 = vld [vmem:[%s227] sm:$0x1]
        %vm238 = vcmask 523264
        %v240 = vsel %vm238, %v228, 0
        %242 = vmatprep.subr.mxu0 0.0
        %243 = vmatpush1.msra.mxu0 0.0
        %244 = vmatprep.subr.mxu0 0.0
        %245 = vmatpush1.msra.mxu0 0.0
        %246 = vmatprep.subr.mxu0 0.0
        %247 = vmatpush1.msra.mxu0 0.0
        %248 = vmatprep.subr.mxu0 0.0
        %249 = vmatpush1.msra.mxu0 0.0
        %250 = vmatprep.subr.mxu0 0.0
        %251 = vmatpush1.msra.mxu0 0.0
        %252 = vmatprep.subr.mxu0 0.0
        %253 = vmatpush1.msra.mxu0 0.0
        %254 = vmatprep.subr.mxu0 0.0
        %255 = vmatpush1.msra.mxu0 0.0
        %256 = vmatprep.subr.mxu0 0.0
        %257 = vmatpush1.msra.mxu0 0.0
        %258 = vmatprep.subr.mxu0 0.0
        %259 = vmatpush1.msra.mxu0 %v236
        %260 = vmatprep.subr.mxu0 0.0
        %261 = vmatpush1.msra.mxu0 %v235
        %262 = vmatprep.subr.mxu0 0.0
        %263 = vmatpush1.msra.mxu0 %v234
        %264 = vmatprep.subr.mxu0 0.0
        %265 = vmatpush1.msra.mxu0 %v233
        %266 = vmatprep.subr.mxu0 0.0
        %267 = vmatpush1.msra.mxu0 %v232
        %268 = vmatprep.subr.mxu0 0.0
        %269 = vmatpush1.msra.mxu0 %v231
        %270 = vmatprep.subr.mxu0 0.0
        %271 = vmatpush1.msra.mxu0 %v230
        %272 = vmatprep.subr.mxu0 0.0
        %273 = vmatpush1.msra.mxu0 %v229
        %274 = vmatprep.subr.mxu0 0.0
        %275 = vmatpush2.msra.mxu0 0.0
        %276 = vmatprep.subr.mxu0 0.0
        %277 = vmatpush2.msra.mxu0 0.0
        %278 = vmatprep.subr.mxu0 0.0
        %279 = vmatpush2.msra.mxu0 0.0
        %280 = vmatprep.subr.mxu0 0.0
        %281 = vmatpush2.msra.mxu0 0.0
        %282 = vmatprep.subr.mxu0 0.0
        %283 = vmatpush2.msra.mxu0 0.0
        %284 = vmatprep.subr.mxu0 0.0
        %285 = vmatpush2.msra.mxu0 0.0
        %286 = vmatprep.subr.mxu0 0.0
        %287 = vmatpush2.msra.mxu0 0.0
        %288 = vmatprep.subr.mxu0 0.0
        %289 = vmatpush2.msra.mxu0 0.0
        %290 = vmatprep.subr.mxu0 0.0
        %291 = vmatpush2.msra.mxu0 0.0
        %292 = vmatprep.subr.mxu0 0.0
        %293 = vmatpush2.msra.mxu0 0.0
        %294 = vmatprep.subr.mxu0 0.0
        %295 = vmatpush2.msra.mxu0 0.0
        %296 = vmatprep.subr.mxu0 0.0
        %297 = vmatpush2.msra.mxu0 0.0
        %298 = vmatprep.subr.mxu0 0.0
        %299 = vmatpush2.msra.mxu0 0.0
        %300 = vmatprep.subr.mxu0 0.0
        %301 = vmatpush2.msra.mxu0 0.0
        %302 = vmatprep.subr.mxu0 0.0
        %303 = vmatpush2.msra.mxu0 0.0
        %304 = vmatprep.subr.mxu0 0.0
        %305 = vmatpush2.msra.mxu0 0.0
        %306 = vmatprep.mubr.f32.mxu0 0.0
        %307 = vmatmul.mubr.f32.gmra.mxu0 %v240
        %v308 = vpop.f32.mrf.mxu0
        %v309 = vadd.f32 %v237, %v308
        %v310 = vpop.f32.mrf.mxu0
        %311 = vdwg.mxu0
        %312 = vst [vmem:[%s224] sm:$0x1] %v309
        %s313 = sand.u32 %s118, 1
        %s314 = scalar_lea.sflag [#allocation4], %s313
        %s315 = sand.u32 %s118, 1
        %s316 = scalar_lea.vmem [#allocation7], %s315
        // Predicated region
        $region41: #{tpu_custom_call.1} parent=31 // pred_check
          %p317 = pneg %p128
        $region42: #{tpu_custom_call.1} parent=31 // pred_check_branch
          %319 = sbr.rel (%p317) target = $region44
        $region43: #{tpu_custom_call.1} parent=31 // pred_region
          %s321 = ssub.s32 16, 16
          %322 = vsyncadd %s314, %s321
          %s323 = sadd.s32 %s25, %s26
          %s324 = smul.addr %s323, 16
          %s325 = scalar_lea.hbm %s3, %s324
          %s327 = sshll.u32 %s316, 4
          %s328 = int_to_ptr.vmem [resolvable:$true] %s327
          %330 = dma.vmem_to_hbm [thread:$0]  %s328, 16, %s325, %s314
        $region44: #{tpu_custom_call.1} parent=31 // pred_fallthru
          _
      $region32: #{tpu_custom_call.1} parent=5 // pred_fallthru
        _
      %p331 = scmp.le.s32.totalorder 2, %s16
      // Predicated region
      $region45: #{tpu_custom_call.1} parent=5 // pred_check
        %p332 = pneg %p331
      $region46: #{tpu_custom_call.1} parent=5 // pred_check_branch
        %334 = sbr.rel (%p332) target = $region48
      $region47: #{tpu_custom_call.1} parent=5 // pred_region
        %s335 = ssub.s32 %s16, 2
        // Predicated region
        $region49: #{tpu_custom_call.1} parent=47 // pred_check
          %p336 = pneg %p134
        $region50: #{tpu_custom_call.1} parent=47 // pred_check_branch
          %338 = sbr.rel (%p336) target = $region52
        $region51: #{tpu_custom_call.1} parent=47 // pred_region
          %s339 = sand.u32 %s119, 1
          %s340 = scalar_lea.sflag [#allocation4], %s339
          %s341 = sand.u32 %s119, 1
          %s342 = scalar_lea.vmem [#allocation7], %s341
          %343 = dma.done %s340, 16
        $region52: #{tpu_custom_call.1} parent=47 // pred_fallthru
          _
      $region48: #{tpu_custom_call.1} parent=5 // pred_fallthru
        _
    $region6: #{tpu_custom_call.1} parent=1 // loop_footer
      %s20 = sadd.s32 1, %s16
    $region7: #{tpu_custom_call.1} parent=1 // loop_footer_branch
      %15 = sbr.rel target = $region3
    $region8: #{tpu_custom_call.1} parent=1 // loop_exit
      _
    %344 = vsyncpa [#allocation3], 1
    %s345 = scalar_lea.sflag [#allocation3], 1
    %346 = vsyncpa %s345, 1
    %347 = vsyncpa [#allocation6], 1
    %348 = vsyncpa [#allocation4], 1
    %s349 = scalar_lea.sflag [#allocation4], 1
    %350 = vsyncpa %s349, 1

</llo_original>
